<compile_context>
chip_gen: v5e
topology: v5e:2x2
jax: 0.10.0
libtpu: 0.0.40
codegen_flags: <defaults>
</compile_context>

<pallas_src>
import jax
import jax.numpy as jnp
import numpy as np
from jax.experimental import pallas as pl
from jax.experimental.pallas import tpu as pltpu


def _stable_softplus(x):
    # log1p(exp(x)) computed without overflow for large positive x.
    return jnp.maximum(x, 0.0) + jnp.log1p(jnp.exp(-jnp.abs(x)))


def bayes_linear_kernel(x_ref, wmu_ref, wrho_ref, weps_ref,
                        bmu_ref, brho_ref, beps_ref, o_ref, acc_ref):
    k = pl.program_id(2)

    @pl.when(k == 0)
    def _():
        acc_ref[...] = jnp.zeros_like(acc_ref)

    # Sample the weight tile: w = mu + softplus(rho) * eps    (tn, tk)
    w_sigma = _stable_softplus(wrho_ref[...])
    w = wmu_ref[...] + w_sigma * weps_ref[...]

    # x (tm, tk) contracted with w (tn, tk) over the K axis -> (tm, tn).
    # dot_general with contracting dims (1,1) == x @ w.T without an explicit
    # transpose (no XLU relayout before the MXU).
    acc_ref[...] += jax.lax.dot_general(
        x_ref[...], w,
        dimension_numbers=(((1,), (1,)), ((), ())),
        preferred_element_type=jnp.float32)

    @pl.when(k == pl.num_programs(2) - 1)
    def _():
        b_sigma = _stable_softplus(brho_ref[...])
        b = bmu_ref[...] + b_sigma * beps_ref[...]            # (1, tn)
        o_ref[...] = (acc_ref[...] + b).astype(o_ref.dtype)


def bayes_linear_frozen_kernel(x_ref, wmu_ref, bmu_ref, o_ref, acc_ref):
    k = pl.program_id(2)

    @pl.when(k == 0)
    def _():
        acc_ref[...] = jnp.zeros_like(acc_ref)

    acc_ref[...] += jax.lax.dot_general(
        x_ref[...], wmu_ref[...],
        dimension_numbers=(((1,), (1,)), ((), ())),
        preferred_element_type=jnp.float32)

    @pl.when(k == pl.num_programs(2) - 1)
    def _():
        o_ref[...] = (acc_ref[...] + bmu_ref[...]).astype(o_ref.dtype)


def _round_up(x, m):
    return (x + m - 1) // m * m


def _pad2(a, rows, cols):
    return jnp.pad(a, ((0, rows - a.shape[0]), (0, cols - a.shape[1])))


def bayes_linear(x, w_mu, w_rho, w_eps, b_mu, b_rho, b_eps, *,
                 is_frozen=False, tm=None, tn=None, tk=None):
    """y = x @ (mu + softplus(rho) * eps).T + (b_mu + softplus(b_rho) * b_eps).

    x: (B, in_dim); weight tensors: (out_dim, in_dim); bias tensors: (out_dim,)
    or (1, out_dim).  All float32.
    """
    B, K = x.shape
    N = w_mu.shape[0]

    # Conservative, cross-generation tile defaults (~5 MiB of double-buffered
    # VMEM).  Tuning knobs: v6e (128 MiB VMEM) can use tn=512, tk=1024;
    # v5e / v7x should stay at tn<=256, tk<=512.
    if tm is None:
        tm = min(_round_up(B, 8), 256)
    if tn is None:
        tn = min(_round_up(N, 128), 256)
    if tk is None:
        tk = min(_round_up(K, 128), 512)

    Bp, Np, Kp = _round_up(B, tm), _round_up(N, tn), _round_up(K, tk)

    # Zero padding is exact: padded eps / mu rows give w == 0, padded K
    # columns of x are zero, padded bias entries are zero; the extra output
    # rows/cols are sliced off below.
    xp = _pad2(x, Bp, Kp)
    wmup = _pad2(w_mu, Np, Kp)
    bmup = _pad2(jnp.reshape(b_mu, (1, -1)), 1, Np)

    grid = (Bp // tm, Np // tn, Kp // tk)
    x_spec = pl.BlockSpec((tm, tk), lambda i, j, k: (i, k))
    w_spec = pl.BlockSpec((tn, tk), lambda i, j, k: (j, k))
    b_spec = pl.BlockSpec((1, tn), lambda i, j, k: (0, j))
    o_spec = pl.BlockSpec((tm, tn), lambda i, j, k: (i, j))

    compiler_params = pltpu.CompilerParams(
        dimension_semantics=("parallel", "parallel", "arbitrary"),
        vmem_limit_bytes=32 * 1024 * 1024)

    matmul_flops = 2 * Bp * Np * Kp

    if is_frozen:
        cost = pl.CostEstimate(
            flops=matmul_flops,
            transcendentals=0,
            bytes_accessed=4 * (Bp * Kp + Np * Kp + Np + Bp * Np))
        out = pl.pallas_call(
            bayes_linear_frozen_kernel,
            out_shape=jax.ShapeDtypeStruct((Bp, Np), x.dtype),
            grid=grid,
            in_specs=[x_spec, w_spec, b_spec],
            out_specs=o_spec,
            scratch_shapes=[pltpu.VMEM((tm, tn), jnp.float32)],
            compiler_params=compiler_params,
            cost_estimate=cost,
        )(xp, wmup, bmup)
        return out[:B, :N]

    wrhop = _pad2(w_rho, Np, Kp)
    wepsp = _pad2(w_eps, Np, Kp)
    brhop = _pad2(jnp.reshape(b_rho, (1, -1)), 1, Np)
    bepsp = _pad2(jnp.reshape(b_eps, (1, -1)), 1, Np)

    cost = pl.CostEstimate(
        flops=matmul_flops + 2 * Np * Kp,
        transcendentals=2 * Np * Kp,
        bytes_accessed=4 * (Bp * Kp + 3 * Np * Kp + 3 * Np + Bp * Np))
    out = pl.pallas_call(
        bayes_linear_kernel,
        out_shape=jax.ShapeDtypeStruct((Bp, Np), x.dtype),
        grid=grid,
        in_specs=[x_spec, w_spec, w_spec, w_spec, b_spec, b_spec, b_spec],
        out_specs=o_spec,
        scratch_shapes=[pltpu.VMEM((tm, tn), jnp.float32)],
        compiler_params=compiler_params,
        cost_estimate=cost,
    )(xp, wmup, wrhop, wepsp, bmup, brhop, bepsp)
    return out[:B, :N]


def _ref_forward(x, w_mu, w_rho, w_eps, b_mu, b_rho, b_eps, is_frozen):
    if is_frozen:
        return x @ w_mu.T + jnp.reshape(b_mu, (1, -1))
    w = w_mu + jax.nn.softplus(w_rho) * w_eps
    b = jnp.reshape(b_mu + jax.nn.softplus(b_rho) * b_eps, (1, -1))
    return x @ w.T + b


def _make_inputs(key, batch, input_dim, output_dim, posterior_rho_init=-5.0):
    k_wmu, k_weps, k_beps, k_x = jax.random.split(key, 4)
    # reset_parameters(): weight_mu ~ U(-sqrt(6/in), sqrt(6/in)),
    # weight_rho = rho_init, bias_mu = 0, bias_rho = rho_init.
    stdv = float(np.sqrt(6.0 / input_dim))
    w_mu = jax.random.uniform(k_wmu, (output_dim, input_dim),
                              minval=-stdv, maxval=stdv, dtype=jnp.float32)
    w_rho = jnp.full((output_dim, input_dim), posterior_rho_init, jnp.float32)
    b_mu = jnp.zeros((output_dim,), jnp.float32)
    b_rho = jnp.full((output_dim,), posterior_rho_init, jnp.float32)
    # Reparameterization noise (torch.randn_like equivalent, fixed seed).
    w_eps = jax.random.normal(k_weps, (output_dim, input_dim), jnp.float32)
    b_eps = jax.random.normal(k_beps, (output_dim,), jnp.float32)
    x = jax.random.normal(k_x, (batch, input_dim), jnp.float32)
    return x, w_mu, w_rho, w_eps, b_mu, b_rho, b_eps


if __name__ == "__main__":
    key = jax.random.PRNGKey(0)
    k_small, k_big = jax.random.split(key)

    # 1) Module-sized toy problem (batch=8, input_dim=32, output_dim=16).
    args = _make_inputs(k_small, batch=8, input_dim=32, output_dim=16)
    y = jax.block_until_ready(bayes_linear(*args, is_frozen=False))
    y_ref = _ref_forward(*args, is_frozen=False)
    np.testing.assert_allclose(np.asarray(y), np.asarray(y_ref),
                               rtol=1e-5, atol=1e-5)

    y_frozen = jax.block_until_ready(bayes_linear(*args, is_frozen=True))
    y_frozen_ref = _ref_forward(*args, is_frozen=True)
    np.testing.assert_allclose(np.asarray(y_frozen), np.asarray(y_frozen_ref),
                               rtol=1e-5, atol=1e-5)

    # 2) Larger shape that exercises the multi-tile grid (2 K-steps, 2 N-tiles)
    #    and the K-axis accumulator path.
    args_big = _make_inputs(k_big, batch=16, input_dim=640, output_dim=384)
    y_big = jax.block_until_ready(bayes_linear(*args_big, is_frozen=False))
    y_big_ref = _ref_forward(*args_big, is_frozen=False)
    np.testing.assert_allclose(np.asarray(y_big), np.asarray(y_big_ref),
                               rtol=1e-4, atol=1e-4)

    print("KERNEL_OK")
</pallas_src>

<mosaic_0001>
module attributes {stable_mosaic.version = 11 : i64} {
  func.func @bayes_linear_kernel(%arg0: i32, %arg1: i32, %arg2: i32, %arg3: memref<8x128xf32, #tpu.memory_space<vmem>>, %arg4: memref<128x128xf32, #tpu.memory_space<vmem>>, %arg5: memref<128x128xf32, #tpu.memory_space<vmem>>, %arg6: memref<128x128xf32, #tpu.memory_space<vmem>>, %arg7: memref<1x128xf32, #tpu.memory_space<vmem>>, %arg8: memref<1x128xf32, #tpu.memory_space<vmem>>, %arg9: memref<1x128xf32, #tpu.memory_space<vmem>>, %arg10: memref<8x128xf32, #tpu.memory_space<vmem>>, %arg11: memref<8x128xf32, #tpu.memory_space<vmem>>) attributes {dimension_semantics = [#tpu.dimension_semantics<parallel>, #tpu.dimension_semantics<parallel>, #tpu.dimension_semantics<arbitrary>], iteration_bounds = array<i64: 1, 1, 1>, scalar_prefetch = 0 : i64, scratch_operands = 1 : i64, tpu.core_type = #tpu.core_type<tc>, window_params = [{transform_indices = @transform_0, window_bounds = array<i64: 8, 128>}, {transform_indices = @transform_1, window_bounds = array<i64: 128, 128>}, {transform_indices = @transform_2, window_bounds = array<i64: 128, 128>}, {transform_indices = @transform_3, window_bounds = array<i64: 128, 128>}, {transform_indices = @transform_4, window_bounds = array<i64: 1, 128>}, {transform_indices = @transform_5, window_bounds = array<i64: 1, 128>}, {transform_indices = @transform_6, window_bounds = array<i64: 1, 128>}, {transform_indices = @transform_7, window_bounds = array<i64: 8, 128>}]} {
    %c0_i32 = arith.constant 0 : i32
    %0 = arith.cmpi eq, %arg2, %c0_i32 : i32
    %1 = arith.extui %0 : i1 to i32
    %c0_i32_0 = arith.constant 0 : i32
    %2 = arith.cmpi ne, %1, %c0_i32_0 : i32
    scf.if %2 {
      %cst_16 = arith.constant 0.000000e+00 : f32
      %24 = vector.broadcast %cst_16 : f32 to vector<8x128xf32>
      %c0_17 = arith.constant 0 : index
      %c0_18 = arith.constant 0 : index
      %25 = vector.load %arg11[%c0_17, %c0_18] : memref<8x128xf32, #tpu.memory_space<vmem>>, vector<8x128xf32>
      tpu.vector_store %arg11[%c0_17, %c0_18], %24 {strides = array<i32>} : memref<8x128xf32, #tpu.memory_space<vmem>>, vector<8x128xf32>,
    } else {
    }
    %c0 = arith.constant 0 : index
    %c0_1 = arith.constant 0 : index
    %3 = vector.load %arg5[%c0, %c0_1] : memref<128x128xf32, #tpu.memory_space<vmem>>, vector<128x128xf32>
    %cst = arith.constant 0.000000e+00 : f32
    %4 = vector.broadcast %cst : f32 to vector<128x128xf32>
    %5 = arith.maximumf %3, %4 : vector<128x128xf32>
    %6 = math.absf %3 : vector<128x128xf32>
    %cst_2 = arith.constant 0.000000e+00 : f32
    %7 = vector.broadcast %cst_2 : f32 to vector<128x128xf32>
    %8 = arith.subf %7, %6 : vector<128x128xf32>
    %9 = math.exp %8 : vector<128x128xf32>
    %10 = math.log1p %9 : vector<128x128xf32>
    %11 = arith.addf %5, %10 : vector<128x128xf32>
    %c0_3 = arith.constant 0 : index
    %c0_4 = arith.constant 0 : index
    %12 = vector.load %arg4[%c0_3, %c0_4] : memref<128x128xf32, #tpu.memory_space<vmem>>, vector<128x128xf32>
    %c0_5 = arith.constant 0 : index
    %c0_6 = arith.constant 0 : index
    %13 = vector.load %arg6[%c0_5, %c0_6] : memref<128x128xf32, #tpu.memory_space<vmem>>, vector<128x128xf32>
    %14 = arith.mulf %11, %13 : vector<128x128xf32>
    %15 = arith.addf %12, %14 : vector<128x128xf32>
    %c0_7 = arith.constant 0 : index
    %c0_8 = arith.constant 0 : index
    %16 = vector.load %arg11[%c0_7, %c0_8] : memref<8x128xf32, #tpu.memory_space<vmem>>, vector<8x128xf32>
    %c0_9 = arith.constant 0 : index
    %c0_10 = arith.constant 0 : index
    %17 = vector.load %arg3[%c0_9, %c0_10] : memref<8x128xf32, #tpu.memory_space<vmem>>, vector<8x128xf32>
    %cst_11 = arith.constant dense<0.000000e+00> : vector<8x128xf32>
    %18 = tpu.matmul %17, %15, %cst_11 {dimension_numbers = #tpu.dot_dimension_numbers<[1], [1], [0], [0], [0, 0, 1, 0], [], []>} : vector<8x128xf32>, vector<128x128xf32>, vector<8x128xf32> -> vector<8x128xf32>
    %19 = arith.addf %16, %18 : vector<8x128xf32>
    %c0_12 = arith.constant 0 : index
    %c0_13 = arith.constant 0 : index
    %20 = vector.load %arg11[%c0_12, %c0_13] : memref<8x128xf32, #tpu.memory_space<vmem>>, vector<8x128xf32>
    tpu.vector_store %arg11[%c0_12, %c0_13], %19 {strides = array<i32>} : memref<8x128xf32, #tpu.memory_space<vmem>>, vector<8x128xf32>,
    %c0_i32_14 = arith.constant 0 : i32
    %21 = arith.cmpi eq, %arg2, %c0_i32_14 : i32
    %22 = arith.extui %21 : i1 to i32
    %c0_i32_15 = arith.constant 0 : i32
    %23 = arith.cmpi ne, %22, %c0_i32_15 : i32
    scf.if %23 {
      %c0_16 = arith.constant 0 : index
      %c0_17 = arith.constant 0 : index
      %24 = vector.load %arg8[%c0_16, %c0_17] : memref<1x128xf32, #tpu.memory_space<vmem>>, vector<1x128xf32>
      %cst_18 = arith.constant 0.000000e+00 : f32
      %25 = vector.broadcast %cst_18 : f32 to vector<1x128xf32>
      %26 = arith.maximumf %24, %25 : vector<1x128xf32>
      %27 = math.absf %24 : vector<1x128xf32>
      %cst_19 = arith.constant 0.000000e+00 : f32
      %28 = vector.broadcast %cst_19 : f32 to vector<1x128xf32>
      %29 = arith.subf %28, %27 : vector<1x128xf32>
      %30 = math.exp %29 : vector<1x128xf32>
      %31 = math.log1p %30 : vector<1x128xf32>
      %32 = arith.addf %26, %31 : vector<1x128xf32>
      %c0_20 = arith.constant 0 : index
      %c0_21 = arith.constant 0 : index
      %33 = vector.load %arg7[%c0_20, %c0_21] : memref<1x128xf32, #tpu.memory_space<vmem>>, vector<1x128xf32>
      %c0_22 = arith.constant 0 : index
      %c0_23 = arith.constant 0 : index
      %34 = vector.load %arg9[%c0_22, %c0_23] : memref<1x128xf32, #tpu.memory_space<vmem>>, vector<1x128xf32>
      %35 = arith.mulf %32, %34 : vector<1x128xf32>
      %36 = arith.addf %33, %35 : vector<1x128xf32>
      %c0_24 = arith.constant 0 : index
      %c0_25 = arith.constant 0 : index
      %37 = vector.load %arg11[%c0_24, %c0_25] : memref<8x128xf32, #tpu.memory_space<vmem>>, vector<8x128xf32>
      %38 = vector.broadcast %36 : vector<1x128xf32> to vector<8x128xf32>
      %39 = arith.addf %37, %38 : vector<8x128xf32>
      %c0_26 = arith.constant 0 : index
      %c0_27 = arith.constant 0 : index
      %40 = vector.load %arg10[%c0_26, %c0_27] : memref<8x128xf32, #tpu.memory_space<vmem>>, vector<8x128xf32>
      tpu.vector_store %arg10[%c0_26, %c0_27], %39 {strides = array<i32>} : memref<8x128xf32, #tpu.memory_space<vmem>>, vector<8x128xf32>,
    } else {
    }
    return
  }
  func.func @transform_0(%arg0: i32, %arg1: i32, %arg2: i32) -> (i32, i32) {
    %c0_i32 = arith.constant 0 : i32
    return %arg0, %arg2 : i32, i32
  }
  func.func @transform_1(%arg0: i32, %arg1: i32, %arg2: i32) -> (i32, i32) {
    %c0_i32 = arith.constant 0 : i32
    return %arg1, %arg2 : i32, i32
  }
  func.func @transform_2(%arg0: i32, %arg1: i32, %arg2: i32) -> (i32, i32) {
    %c0_i32 = arith.constant 0 : i32
    return %arg1, %arg2 : i32, i32
  }
  func.func @transform_3(%arg0: i32, %arg1: i32, %arg2: i32) -> (i32, i32) {
    %c0_i32 = arith.constant 0 : i32
    return %arg1, %arg2 : i32, i32
  }
  func.func @transform_4(%arg0: i32, %arg1: i32, %arg2: i32) -> (i32, i32) {
    %c0_i32 = arith.constant 0 : i32
    %c0_i32_0 = arith.constant 0 : i32
    return %c0_i32, %arg1 : i32, i32
  }
  func.func @transform_5(%arg0: i32, %arg1: i32, %arg2: i32) -> (i32, i32) {
    %c0_i32 = arith.constant 0 : i32
    %c0_i32_0 = arith.constant 0 : i32
    return %c0_i32, %arg1 : i32, i32
  }
  func.func @transform_6(%arg0: i32, %arg1: i32, %arg2: i32) -> (i32, i32) {
    %c0_i32 = arith.constant 0 : i32
    %c0_i32_0 = arith.constant 0 : i32
    return %c0_i32, %arg1 : i32, i32
  }
  func.func @transform_7(%arg0: i32, %arg1: i32, %arg2: i32) -> (i32, i32) {
    %c0_i32 = arith.constant 0 : i32
    return %arg0, %arg1 : i32, i32
  }
}

</mosaic_0001>

<llo_original>
// kernel: tpu_custom_call.1
$region0: #{tpu_custom_call.1}
  #allocation0 [shape = 'u32[]', space=smem, size = 0x4, offset = 0x4, fixed_abs, tag = 'smem constant byte address 0x4 - core index']
  #allocation1 [shape = 'u32[72,128]{1,0:T(1,128)}', space=vmem, size = 0x9000, scoped, tag = 'internal scratch']
  #allocation2 [shape = 'f32[8,128]{1,0:T(8,128)}', space=vmem, size = 0x1000, scoped, tag = 'scratch operand']
  %s0 = inlined_call_operand.hbm [shape: f32[8,128], index: 0, kind: input, shape index: {}]
  %s1 = inlined_call_operand.hbm [shape: f32[128,128], index: 1, kind: input, shape index: {}]
  %s2 = inlined_call_operand.hbm [shape: f32[128,128], index: 2, kind: input, shape index: {}]
  %s3 = inlined_call_operand.hbm [shape: f32[128,128], index: 3, kind: input, shape index: {}]
  %s4 = inlined_call_operand.vmem [shape: f32[1,128], index: 4, kind: input, shape index: {}]
  %s5 = inlined_call_operand.vmem [shape: f32[1,128], index: 5, kind: input, shape index: {}]
  %s6 = inlined_call_operand.vmem [shape: f32[1,128], index: 6, kind: input, shape index: {}]
  %s7 = inlined_call_operand.hbm [shape: f32[8,128], index: 7, kind: output, shape index: {}]
  %s8 = sld [smem:[#allocation0]]
  $region62: #{tpu_custom_call.1} parent=0
    _
  %s10 = ssub.s32 1, %s8
  %s11 = scalar_select 0, %s10, %s8
  $region1: #{tpu_custom_call.1} parent=0
    #allocation3 [shape = 'u8[4096]{0}', space=vmem, size = 0x1000, scoped, tag = 'input window, operand 0, single buffered']
    #allocation4 [shape = 's32[1]{0}', space=sflag, size = 0x4, scoped, tag = 'scoped memory for tpu_custom_call.1']
    #allocation5 [shape = 's32[1]{0}', space=sflag, size = 0x4, scoped, tag = 'scoped memory for tpu_custom_call.1']
    #allocation6 [shape = 'u8[65536]{0}', space=vmem, size = 0x10000, scoped, tag = 'input window, operand 1, single buffered']
    #allocation7 [shape = 's32[1]{0}', space=sflag, size = 0x4, scoped, tag = 'scoped memory for tpu_custom_call.1']
    #allocation8 [shape = 'u8[65536]{0}', space=vmem, size = 0x10000, scoped, tag = 'input window, operand 2, single buffered']
    #allocation9 [shape = 'u8[65536]{0}', space=vmem, size = 0x10000, scoped, tag = 'input window, operand 3, single buffered']
    #allocation10 [shape = 's32[1]{0}', space=sflag, size = 0x4, scoped, tag = 'scoped memory for tpu_custom_call.1']
    #allocation11 [shape = 'u8[4096]{0}', space=vmem, size = 0x1000, scoped, tag = 'output window, operand 0, single buffered']
    %12 = vsyncpa [#allocation4], 0
    %13 = vsyncpa [#allocation7], 0
    %14 = vsyncpa [#allocation10], 0
    %15 = vsyncpa [#allocation5], 0
    // Predicated region
    $region2: #{tpu_custom_call.1} parent=1 // pred_check
      _
    $region3: #{tpu_custom_call.1} parent=1 // pred_check_branch
      %17 = sbr.rel (0) target = $region5
    $region4: #{tpu_custom_call.1} parent=1 // pred_region
      %19 = vsyncadd [#allocation4], 0
      %s21 = sshll.u32 %s0, 4
      %s22 = int_to_ptr.hbm [resolvable:$true] %s21
      %s23 = sshll.u32 [#allocation3], 4
      %s24 = int_to_ptr.vmem [resolvable:$true] %s23
      %26 = dma.hbm_to_vmem [thread:$0]  %s22, 128, %s24, [#allocation4]
    $region5: #{tpu_custom_call.1} parent=1 // pred_fallthru
      _
    // Predicated region
    $region6: #{tpu_custom_call.1} parent=1 // pred_check
      _
    $region7: #{tpu_custom_call.1} parent=1 // pred_check_branch
      %28 = sbr.rel (0) target = $region9
    $region8: #{tpu_custom_call.1} parent=1 // pred_region
      %30 = vsyncadd [#allocation7], 0
      %s31 = sshll.u32 %s1, 4
      %s32 = int_to_ptr.hbm [resolvable:$true] %s31
      %s33 = sshll.u32 [#allocation6], 4
      %s34 = int_to_ptr.vmem [resolvable:$true] %s33
      %39 = dma.hbm_to_vmem [thread:$0]  %s32, 2048, %s34, [#allocation7], 128, 128, 8
    $region9: #{tpu_custom_call.1} parent=1 // pred_fallthru
      _
    // Predicated region
    $region10: #{tpu_custom_call.1} parent=1 // pred_check
      _
    $region11: #{tpu_custom_call.1} parent=1 // pred_check_branch
      %41 = sbr.rel (0) target = $region13
    $region12: #{tpu_custom_call.1} parent=1 // pred_region
      %43 = vsyncadd [#allocation7], 0
      %s44 = sshll.u32 %s2, 4
      %s45 = int_to_ptr.hbm [resolvable:$true] %s44
      %s46 = sshll.u32 [#allocation8], 4
      %s47 = int_to_ptr.vmem [resolvable:$true] %s46
      %52 = dma.hbm_to_vmem [thread:$0]  %s45, 2048, %s47, [#allocation7], 128, 128, 8
    $region13: #{tpu_custom_call.1} parent=1 // pred_fallthru
      _
    // Predicated region
    $region14: #{tpu_custom_call.1} parent=1 // pred_check
      _
    $region15: #{tpu_custom_call.1} parent=1 // pred_check_branch
      %54 = sbr.rel (0) target = $region17
    $region16: #{tpu_custom_call.1} parent=1 // pred_region
      %56 = vsyncadd [#allocation10], 0
      %s57 = sshll.u32 %s3, 4
      %s58 = int_to_ptr.hbm [resolvable:$true] %s57
      %s59 = sshll.u32 [#allocation9], 4
      %s60 = int_to_ptr.vmem [resolvable:$true] %s59
      %65 = dma.hbm_to_vmem [thread:$0]  %s58, 2048, %s60, [#allocation10], 128, 128, 8
    $region17: #{tpu_custom_call.1} parent=1 // pred_fallthru
      _
    // Predicated region
    $region18: #{tpu_custom_call.1} parent=1 // pred_check
      _
    $region19: #{tpu_custom_call.1} parent=1 // pred_check_branch
      %67 = sbr.rel (0) target = $region21
    $region20: #{tpu_custom_call.1} parent=1 // pred_region
      _
    $region21: #{tpu_custom_call.1} parent=1 // pred_fallthru
      _
    // Predicated region
    $region22: #{tpu_custom_call.1} parent=1 // pred_check
      _
    $region23: #{tpu_custom_call.1} parent=1 // pred_check_branch
      %69 = sbr.rel (0) target = $region25
    $region24: #{tpu_custom_call.1} parent=1 // pred_region
      _
    $region25: #{tpu_custom_call.1} parent=1 // pred_fallthru
      _
    // Predicated region
    $region26: #{tpu_custom_call.1} parent=1 // pred_check
      _
    $region27: #{tpu_custom_call.1} parent=1 // pred_check_branch
      %71 = sbr.rel (0) target = $region29
    $region28: #{tpu_custom_call.1} parent=1 // pred_region
      _
    $region29: #{tpu_custom_call.1} parent=1 // pred_fallthru
      _
    // Predicated region
    $region30: #{tpu_custom_call.1} parent=1 // pred_check
      _
    $region31: #{tpu_custom_call.1} parent=1 // pred_check_branch
      %73 = sbr.rel (0) target = $region33
    $region32: #{tpu_custom_call.1} parent=1 // pred_region
      %75 = dma.done [#allocation4], 128
    $region33: #{tpu_custom_call.1} parent=1 // pred_fallthru
      _
    // Predicated region
    $region34: #{tpu_custom_call.1} parent=1 // pred_check
      _
    $region35: #{tpu_custom_call.1} parent=1 // pred_check_branch
      %77 = sbr.rel (0) target = $region37
    $region36: #{tpu_custom_call.1} parent=1 // pred_region
      %79 = dma.done [#allocation7], 2048
    $region37: #{tpu_custom_call.1} parent=1 // pred_fallthru
      _
    // Predicated region
    $region38: #{tpu_custom_call.1} parent=1 // pred_check
      _
    $region39: #{tpu_custom_call.1} parent=1 // pred_check_branch
      %81 = sbr.rel (0) target = $region41
    $region40: #{tpu_custom_call.1} parent=1 // pred_region
      %83 = dma.done [#allocation7], 2048
    $region41: #{tpu_custom_call.1} parent=1 // pred_fallthru
      _
    // Predicated region
    $region42: #{tpu_custom_call.1} parent=1 // pred_check
      _
    $region43: #{tpu_custom_call.1} parent=1 // pred_check_branch
      %85 = sbr.rel (0) target = $region45
    $region44: #{tpu_custom_call.1} parent=1 // pred_region
      %87 = dma.done [#allocation10], 2048
    $region45: #{tpu_custom_call.1} parent=1 // pred_fallthru
      _
    %p88 = scmp.eq.s32.totalorder 0, 0
    // Predicated region
    $region46: #{tpu_custom_call.1} parent=1 // pred_check
      %p89 = pneg %p88
    $region47: #{tpu_custom_call.1} parent=1 // pred_check_branch
      %91 = sbr.rel (%p89) target = $region49
    $region48: #{tpu_custom_call.1} parent=1 // pred_region
      %92 = vst [vmem:[#allocation2] sm:$0xff] 0.0
    $region49: #{tpu_custom_call.1} parent=1 // pred_fallthru
      _
    %v93 = vld [vmem:[#allocation8] sm:$0xff]
    %v94 = vld [vmem:[#allocation8 + $0x8] sm:$0xff]
    %v95 = vld [vmem:[#allocation8 + $0x10] sm:$0xff]
    %v96 = vld [vmem:[#allocation8 + $0x18] sm:$0xff]
    %v97 = vld [vmem:[#allocation8 + $0x20] sm:$0xff]
    %v98 = vld [vmem:[#allocation8 + $0x28] sm:$0xff]
    %v99 = vld [vmem:[#allocation8 + $0x30] sm:$0xff]
    %v100 = vld [vmem:[#allocation8 + $0x38] sm:$0xff]
    %v101 = vld [vmem:[#allocation8 + $0x40] sm:$0xff]
    %v102 = vld [vmem:[#allocation8 + $0x48] sm:$0xff]
    %v103 = vld [vmem:[#allocation8 + $0x50] sm:$0xff]
    %v104 = vld [vmem:[#allocation8 + $0x58] sm:$0xff]
    %v105 = vld [vmem:[#allocation8 + $0x60] sm:$0xff]
    %v106 = vld [vmem:[#allocation8 + $0x68] sm:$0xff]
    %v107 = vld [vmem:[#allocation8 + $0x70] sm:$0xff]
    %v108 = vld [vmem:[#allocation8 + $0x78] sm:$0xff]
    %v109 = vmax.f32 %v93, 0.0
    %v110 = vmax.f32 %v94, 0.0
    %v111 = vmax.f32 %v95, 0.0
    %v112 = vmax.f32 %v96, 0.0
    %v113 = vmax.f32 %v97, 0.0
    %v114 = vmax.f32 %v98, 0.0
    %v115 = vmax.f32 %v99, 0.0
    %v116 = vmax.f32 %v100, 0.0
    %v117 = vmax.f32 %v101, 0.0
    %v118 = vmax.f32 %v102, 0.0
    %v119 = vmax.f32 %v103, 0.0
    %v120 = vmax.f32 %v104, 0.0
    %v121 = vmax.f32 %v105, 0.0
    %v122 = vmax.f32 %v106, 0.0
    %v123 = vmax.f32 %v107, 0.0
    %v124 = vmax.f32 %v108, 0.0
    %v125 = vand.u32 2147483647, %v93
    %v126 = vand.u32 2147483647, %v94
    %v127 = vand.u32 2147483647, %v95
    %v128 = vand.u32 2147483647, %v96
    %v129 = vand.u32 2147483647, %v97
    %v130 = vand.u32 2147483647, %v98
    %v131 = vand.u32 2147483647, %v99
    %v132 = vand.u32 2147483647, %v100
    %v133 = vand.u32 2147483647, %v101
    %v134 = vand.u32 2147483647, %v102
    %v135 = vand.u32 2147483647, %v103
    %v136 = vand.u32 2147483647, %v104
    %v137 = vand.u32 2147483647, %v105
    %v138 = vand.u32 2147483647, %v106
    %v139 = vand.u32 2147483647, %v107
    %v140 = vand.u32 2147483647, %v108
    %v141 = vsub.f32 0.0, %v125
    %v142 = vsub.f32 0.0, %v126
    %v143 = vsub.f32 0.0, %v127
    %v144 = vsub.f32 0.0, %v128
    %v145 = vsub.f32 0.0, %v129
    %v146 = vsub.f32 0.0, %v130
    %v147 = vsub.f32 0.0, %v131
    %v148 = vsub.f32 0.0, %v132
    %v149 = vsub.f32 0.0, %v133
    %v150 = vsub.f32 0.0, %v134
    %v151 = vsub.f32 0.0, %v135
    %v152 = vsub.f32 0.0, %v136
    %v153 = vsub.f32 0.0, %v137
    %v154 = vsub.f32 0.0, %v138
    %v155 = vsub.f32 0.0, %v139
    %v156 = vsub.f32 0.0, %v140
    %v157 = vmul.f32 %v141, 1.442695
    %v158 = vpow.pop %v157
    %v159 = vmul.f32 %v142, 1.442695
    %v160 = vpow.pop %v159
    %v161 = vmul.f32 %v143, 1.442695
    %v162 = vpow.pop %v161
    %v163 = vmul.f32 %v144, 1.442695
    %v164 = vpow.pop %v163
    %v165 = vmul.f32 %v145, 1.442695
    %v166 = vpow.pop %v165
    %v167 = vmul.f32 %v146, 1.442695
    %v168 = vpow.pop %v167
    %v169 = vmul.f32 %v147, 1.442695
    %v170 = vpow.pop %v169
    %v171 = vmul.f32 %v148, 1.442695
    %v172 = vpow.pop %v171
    %v173 = vmul.f32 %v149, 1.442695
    %v174 = vpow.pop %v173
    %v175 = vmul.f32 %v150, 1.442695
    %v176 = vpow.pop %v175
    %v177 = vmul.f32 %v151, 1.442695
    %v178 = vpow.pop %v177
    %v179 = vmul.f32 %v152, 1.442695
    %v180 = vpow.pop %v179
    %v181 = vmul.f32 %v153, 1.442695
    %v182 = vpow.pop %v181
    %v183 = vmul.f32 %v154, 1.442695
    %v184 = vpow.pop %v183
    %v185 = vmul.f32 %v155, 1.442695
    %v186 = vpow.pop %v185
    %v187 = vmul.f32 %v156, 1.442695
    %v188 = vpow.pop %v187
    %v189 = vadd.f32 %v158, 1.0
    %v190 = vlog2.pop %v189
    %v191 = vmul.f32 %v190, 0.6931472
    %v192 = vmul.f32 -0.5, %v158
    %v193 = vadd.f32 %v192, 1.0
    %v194 = vmul.f32 %v193, %v158
    %v195 = vand.u32 2147483647, %v158
    %vm196 = vcmp.lt.f32.partialorder %v195, 0.0004427343
    %v197 = vsel %vm196, %v194, %v191
    %v198 = vadd.f32 %v160, 1.0
    %v199 = vlog2.pop %v198
    %v200 = vmul.f32 %v199, 0.6931472
    %v201 = vmul.f32 -0.5, %v160
    %v202 = vadd.f32 %v201, 1.0
    %v203 = vmul.f32 %v202, %v160
    %v204 = vand.u32 2147483647, %v160
    %vm205 = vcmp.lt.f32.partialorder %v204, 0.0004427343
    %v206 = vsel %vm205, %v203, %v200
    %v207 = vadd.f32 %v162, 1.0
    %v208 = vlog2.pop %v207
    %v209 = vmul.f32 %v208, 0.6931472
    %v210 = vmul.f32 -0.5, %v162
    %v211 = vadd.f32 %v210, 1.0
    %v212 = vmul.f32 %v211, %v162
    %v213 = vand.u32 2147483647, %v162
    %vm214 = vcmp.lt.f32.partialorder %v213, 0.0004427343
    %v215 = vsel %vm214, %v212, %v209
    %v216 = vadd.f32 %v164, 1.0
    %v217 = vlog2.pop %v216
    %v218 = vmul.f32 %v217, 0.6931472
    %v219 = vmul.f32 -0.5, %v164
    %v220 = vadd.f32 %v219, 1.0
    %v221 = vmul.f32 %v220, %v164
    %v222 = vand.u32 2147483647, %v164
    %vm223 = vcmp.lt.f32.partialorder %v222, 0.0004427343
    %v224 = vsel %vm223, %v221, %v218
    %v225 = vadd.f32 %v166, 1.0
    %v226 = vlog2.pop %v225
    %v227 = vmul.f32 %v226, 0.6931472
    %v228 = vmul.f32 -0.5, %v166
    %v229 = vadd.f32 %v228, 1.0
    %v230 = vmul.f32 %v229, %v166
    %v231 = vand.u32 2147483647, %v166
    %vm232 = vcmp.lt.f32.partialorder %v231, 0.0004427343
    %v233 = vsel %vm232, %v230, %v227
    %v234 = vadd.f32 %v168, 1.0
    %v235 = vlog2.pop %v234
    %v236 = vmul.f32 %v235, 0.6931472
    %v237 = vmul.f32 -0.5, %v168
    %v238 = vadd.f32 %v237, 1.0
    %v239 = vmul.f32 %v238, %v168
    %v240 = vand.u32 2147483647, %v168
    %vm241 = vcmp.lt.f32.partialorder %v240, 0.0004427343
    %v242 = vsel %vm241, %v239, %v236
    %v243 = vadd.f32 %v170, 1.0
    %v244 = vlog2.pop %v243
    %v245 = vmul.f32 %v244, 0.6931472
    %v246 = vmul.f32 -0.5, %v170
    %v247 = vadd.f32 %v246, 1.0
    %v248 = vmul.f32 %v247, %v170
    %v249 = vand.u32 2147483647, %v170
    %vm250 = vcmp.lt.f32.partialorder %v249, 0.0004427343
    %v251 = vsel %vm250, %v248, %v245
    %v252 = vadd.f32 %v172, 1.0
    %v253 = vlog2.pop %v252
    %v254 = vmul.f32 %v253, 0.6931472
    %v255 = vmul.f32 -0.5, %v172
    %v256 = vadd.f32 %v255, 1.0
    %v257 = vmul.f32 %v256, %v172
    %v258 = vand.u32 2147483647, %v172
    %vm259 = vcmp.lt.f32.partialorder %v258, 0.0004427343
    %v260 = vsel %vm259, %v257, %v254
    %v261 = vadd.f32 %v174, 1.0
    %v262 = vlog2.pop %v261
    %v263 = vmul.f32 %v262, 0.6931472
    %v264 = vmul.f32 -0.5, %v174
    %v265 = vadd.f32 %v264, 1.0
    %v266 = vmul.f32 %v265, %v174
    %v267 = vand.u32 2147483647, %v174
    %vm268 = vcmp.lt.f32.partialorder %v267, 0.0004427343
    %v269 = vsel %vm268, %v266, %v263
    %v270 = vadd.f32 %v176, 1.0
    %v271 = vlog2.pop %v270
    %v272 = vmul.f32 %v271, 0.6931472
    %v273 = vmul.f32 -0.5, %v176
    %v274 = vadd.f32 %v273, 1.0
    %v275 = vmul.f32 %v274, %v176
    %v276 = vand.u32 2147483647, %v176
    %vm277 = vcmp.lt.f32.partialorder %v276, 0.0004427343
    %v278 = vsel %vm277, %v275, %v272
    %v279 = vadd.f32 %v178, 1.0
    %v280 = vlog2.pop %v279
    %v281 = vmul.f32 %v280, 0.6931472
    %v282 = vmul.f32 -0.5, %v178
    %v283 = vadd.f32 %v282, 1.0
    %v284 = vmul.f32 %v283, %v178
    %v285 = vand.u32 2147483647, %v178
    %vm286 = vcmp.lt.f32.partialorder %v285, 0.0004427343
    %v287 = vsel %vm286, %v284, %v281
    %v288 = vadd.f32 %v180, 1.0
    %v289 = vlog2.pop %v288
    %v290 = vmul.f32 %v289, 0.6931472
    %v291 = vmul.f32 -0.5, %v180
    %v292 = vadd.f32 %v291, 1.0
    %v293 = vmul.f32 %v292, %v180
    %v294 = vand.u32 2147483647, %v180
    %vm295 = vcmp.lt.f32.partialorder %v294, 0.0004427343
    %v296 = vsel %vm295, %v293, %v290
    %v297 = vadd.f32 %v182, 1.0
    %v298 = vlog2.pop %v297
    %v299 = vmul.f32 %v298, 0.6931472
    %v300 = vmul.f32 -0.5, %v182
    %v301 = vadd.f32 %v300, 1.0
    %v302 = vmul.f32 %v301, %v182
    %v303 = vand.u32 2147483647, %v182
    %vm304 = vcmp.lt.f32.partialorder %v303, 0.0004427343
    %v305 = vsel %vm304, %v302, %v299
    %v306 = vadd.f32 %v184, 1.0
    %v307 = vlog2.pop %v306
    %v308 = vmul.f32 %v307, 0.6931472
    %v309 = vmul.f32 -0.5, %v184
    %v310 = vadd.f32 %v309, 1.0
    %v311 = vmul.f32 %v310, %v184
    %v312 = vand.u32 2147483647, %v184
    %vm313 = vcmp.lt.f32.partialorder %v312, 0.0004427343
    %v314 = vsel %vm313, %v311, %v308
    %v315 = vadd.f32 %v186, 1.0
    %v316 = vlog2.pop %v315
    %v317 = vmul.f32 %v316, 0.6931472
    %v318 = vmul.f32 -0.5, %v186
    %v319 = vadd.f32 %v318, 1.0
    %v320 = vmul.f32 %v319, %v186
    %v321 = vand.u32 2147483647, %v186
    %vm322 = vcmp.lt.f32.partialorder %v321, 0.0004427343
    %v323 = vsel %vm322, %v320, %v317
    %v324 = vadd.f32 %v188, 1.0
    %v325 = vlog2.pop %v324
    %v326 = vmul.f32 %v325, 0.6931472
    %v327 = vmul.f32 -0.5, %v188
    %v328 = vadd.f32 %v327, 1.0
    %v329 = vmul.f32 %v328, %v188
    %v330 = vand.u32 2147483647, %v188
    %vm331 = vcmp.lt.f32.partialorder %v330, 0.0004427343
    %v332 = vsel %vm331, %v329, %v326
    %v333 = vadd.f32 %v109, %v197
    %v334 = vadd.f32 %v110, %v206
    %v335 = vadd.f32 %v111, %v215
    %v336 = vadd.f32 %v112, %v224
    %v337 = vadd.f32 %v113, %v233
    %v338 = vadd.f32 %v114, %v242
    %v339 = vadd.f32 %v115, %v251
    %v340 = vadd.f32 %v116, %v260
    %v341 = vadd.f32 %v117, %v269
    %v342 = vadd.f32 %v118, %v278
    %v343 = vadd.f32 %v119, %v287
    %v344 = vadd.f32 %v120, %v296
    %v345 = vadd.f32 %v121, %v305
    %v346 = vadd.f32 %v122, %v314
    %v347 = vadd.f32 %v123, %v323
    %v348 = vadd.f32 %v124, %v332
    %v349 = vld [vmem:[#allocation6] sm:$0xff]
    %v350 = vld [vmem:[#allocation6 + $0x8] sm:$0xff]
    %v351 = vld [vmem:[#allocation6 + $0x10] sm:$0xff]
    %v352 = vld [vmem:[#allocation6 + $0x18] sm:$0xff]
    %v353 = vld [vmem:[#allocation6 + $0x20] sm:$0xff]
    %v354 = vld [vmem:[#allocation6 + $0x28] sm:$0xff]
    %v355 = vld [vmem:[#allocation6 + $0x30] sm:$0xff]
    %v356 = vld [vmem:[#allocation6 + $0x38] sm:$0xff]
    %v357 = vld [vmem:[#allocation6 + $0x40] sm:$0xff]
    %v358 = vld [vmem:[#allocation6 + $0x48] sm:$0xff]
    %v359 = vld [vmem:[#allocation6 + $0x50] sm:$0xff]
    %v360 = vld [vmem:[#allocation6 + $0x58] sm:$0xff]
    %v361 = vld [vmem:[#allocation6 + $0x60] sm:$0xff]
    %v362 = vld [vmem:[#allocation6 + $0x68] sm:$0xff]
    %v363 = vld [vmem:[#allocation6 + $0x70] sm:$0xff]
    %v364 = vld [vmem:[#allocation6 + $0x78] sm:$0xff]
    %v365 = vld [vmem:[#allocation9] sm:$0xff]
    %v366 = vld [vmem:[#allocation9 + $0x8] sm:$0xff]
    %v367 = vld [vmem:[#allocation9 + $0x10] sm:$0xff]
    %v368 = vld [vmem:[#allocation9 + $0x18] sm:$0xff]
    %v369 = vld [vmem:[#allocation9 + $0x20] sm:$0xff]
    %v370 = vld [vmem:[#allocation9 + $0x28] sm:$0xff]
    %v371 = vld [vmem:[#allocation9 + $0x30] sm:$0xff]
    %v372 = vld [vmem:[#allocation9 + $0x38] sm:$0xff]
    %v373 = vld [vmem:[#allocation9 + $0x40] sm:$0xff]
    %v374 = vld [vmem:[#allocation9 + $0x48] sm:$0xff]
    %v375 = vld [vmem:[#allocation9 + $0x50] sm:$0xff]
    %v376 = vld [vmem:[#allocation9 + $0x58] sm:$0xff]
    %v377 = vld [vmem:[#allocation9 + $0x60] sm:$0xff]
    %v378 = vld [vmem:[#allocation9 + $0x68] sm:$0xff]
    %v379 = vld [vmem:[#allocation9 + $0x70] sm:$0xff]
    %v380 = vld [vmem:[#allocation9 + $0x78] sm:$0xff]
    %v381 = vmul.f32 %v333, %v365
    %v382 = vmul.f32 %v334, %v366
    %v383 = vmul.f32 %v335, %v367
    %v384 = vmul.f32 %v336, %v368
    %v385 = vmul.f32 %v337, %v369
    %v386 = vmul.f32 %v338, %v370
    %v387 = vmul.f32 %v339, %v371
    %v388 = vmul.f32 %v340, %v372
    %v389 = vmul.f32 %v341, %v373
    %v390 = vmul.f32 %v342, %v374
    %v391 = vmul.f32 %v343, %v375
    %v392 = vmul.f32 %v344, %v376
    %v393 = vmul.f32 %v345, %v377
    %v394 = vmul.f32 %v346, %v378
    %v395 = vmul.f32 %v347, %v379
    %v396 = vmul.f32 %v348, %v380
    %v397 = vadd.f32 %v349, %v381
    %v398 = vadd.f32 %v350, %v382
    %v399 = vadd.f32 %v351, %v383
    %v400 = vadd.f32 %v352, %v384
    %v401 = vadd.f32 %v353, %v385
    %v402 = vadd.f32 %v354, %v386
    %v403 = vadd.f32 %v355, %v387
    %v404 = vadd.f32 %v356, %v388
    %v405 = vadd.f32 %v357, %v389
    %v406 = vadd.f32 %v358, %v390
    %v407 = vadd.f32 %v359, %v391
    %v408 = vadd.f32 %v360, %v392
    %v409 = vadd.f32 %v361, %v393
    %v410 = vadd.f32 %v362, %v394
    %v411 = vadd.f32 %v363, %v395
    %v412 = vadd.f32 %v364, %v396
    %v413 = vld [vmem:[#allocation2] sm:$0xff]
    %v414 = vld [vmem:[#allocation3] sm:$0xff]
    %415 = vmatpush.xpose.msra.mxu0 %v412
    %416 = vmatpush.xpose.msra.mxu0 %v411
    %417 = vmatpush.xpose.msra.mxu0 %v410
    %418 = vmatpush.xpose.msra.mxu0 %v409
    %419 = vmatpush.xpose.msra.mxu0 %v408
    %420 = vmatpush.xpose.msra.mxu0 %v407
    %421 = vmatpush.xpose.msra.mxu0 %v406
    %422 = vmatpush.xpose.msra.mxu0 %v405
    %423 = vmatpush.xpose.msra.mxu0 %v404
    %424 = vmatpush.xpose.msra.mxu0 %v403
    %425 = vmatpush.xpose.msra.mxu0 %v402
    %426 = vmatpush.xpose.msra.mxu0 %v401
    %427 = vmatpush.xpose.msra.mxu0 %v400
    %428 = vmatpush.xpose.msra.mxu0 %v399
    %429 = vmatpush.xpose.msra.mxu0 %v398
    %430 = vmatpush.xpose.msra.mxu0 %v397
    %431 = vmatmul.f32.gmra.mxu0 %v414
    %v432 = vpop.f32.mrf.mxu0
    %v433 = vadd.f32 0.0, %v432
    %434 = vdwg.mxu0
    %v435 = vadd.f32 %v413, %v433
    %436 = vst [vmem:[#allocation2] sm:$0xff] %v435
    // Predicated region
    $region50: #{tpu_custom_call.1} parent=1 // pred_check
      %p437 = pneg %p88
    $region51: #{tpu_custom_call.1} parent=1 // pred_check_branch
      %439 = sbr.rel (%p437) target = $region53
    $region52: #{tpu_custom_call.1} parent=1 // pred_region
      %v440 = vld [vmem:[%s5] sm:$0x1]
      %v441 = vmax.f32 %v440, 0.0
      %v442 = vand.u32 2147483647, %v440
      %v443 = vsub.f32 0.0, %v442
      %v444 = vmul.f32 %v443, 1.442695
      %v445 = vpow.pop %v444
      %v446 = vadd.f32 %v445, 1.0
      %v447 = vlog2.pop %v446
      %v448 = vmul.f32 %v447, 0.6931472
      %v449 = vmul.f32 -0.5, %v445
      %v450 = vadd.f32 %v449, 1.0
      %v451 = vmul.f32 %v450, %v445
      %v452 = vand.u32 2147483647, %v445
      %vm453 = vcmp.lt.f32.partialorder %v452, 0.0004427343
      %v454 = vsel %vm453, %v451, %v448
      %v455 = vadd.f32 %v441, %v454
      %v456 = vld [vmem:[%s4] sm:$0x1]
      %v457 = vld [vmem:[%s6] sm:$0x1]
      %v458 = vmul.f32 %v455, %v457
      %v459 = vadd.f32 %v456, %v458
      %v460 = vld [vmem:[#allocation2] sm:$0xff]
      %v462 = vperm.slane %v459, 0
      %v464 = vadd.f32 %v460, %v462
      %465 = vst [vmem:[#allocation11] sm:$0xff] %v464
    $region53: #{tpu_custom_call.1} parent=1 // pred_fallthru
      _
    // Predicated region
    $region54: #{tpu_custom_call.1} parent=1 // pred_check
      _
    $region55: #{tpu_custom_call.1} parent=1 // pred_check_branch
      %467 = sbr.rel (0) target = $region57
    $region56: #{tpu_custom_call.1} parent=1 // pred_region
      %469 = vsyncadd [#allocation5], 0
      %s471 = sshll.u32 [#allocation11], 4
      %s472 = int_to_ptr.vmem [resolvable:$true] %s471
      %s473 = sshll.u32 %s7, 4
      %s474 = int_to_ptr.hbm [resolvable:$true] %s473
      %476 = dma.vmem_to_hbm [thread:$0]  %s472, 128, %s474, [#allocation5]
    $region57: #{tpu_custom_call.1} parent=1 // pred_fallthru
      _
    // Predicated region
    $region58: #{tpu_custom_call.1} parent=1 // pred_check
      _
    $region59: #{tpu_custom_call.1} parent=1 // pred_check_branch
      %478 = sbr.rel (0) target = $region61
    $region60: #{tpu_custom_call.1} parent=1 // pred_region
      %480 = dma.done [#allocation5], 128
    $region61: #{tpu_custom_call.1} parent=1 // pred_fallthru
      _
    %481 = vsyncpa [#allocation4], 1
    %482 = vsyncpa [#allocation7], 1
    %483 = vsyncpa [#allocation10], 1
    %484 = vsyncpa [#allocation5], 1

</llo_original>
